<compile_context>
chip_gen: v6e
topology: v6e:2x2x1
jax: 0.10.0
libtpu: 0.0.40
codegen_flags: <defaults>
</compile_context>

<pallas_src>
import functools

import jax
import jax.numpy as jnp
from jax.experimental import pallas as pl
from jax.experimental.pallas import tpu as pltpu

M_MARGIN = 0.35
S_SCALE = 30.0


def _round_up(x, mult):
    return ((x + mult - 1) // mult) * mult


def _pick_tc(cp, target):
    """Largest multiple of 128 that divides cp (a multiple of 128) and is <= target."""
    d = cp // 128
    best = 128
    for k in range(1, d + 1):
        if 128 * k > max(target, 128):
            break
        if d % k == 0:
            best = 128 * k
    return best


def _am_softmax_kernel(emb_ref, ker_ref, lbl_ref, out_ref, inv_s_ref, *, tc, m, s):
    # emb_ref:   (tb, E)  embeddings row tile        (compute dtype)
    # ker_ref:   (E, tc)  class-kernel column tile   (compute dtype)
    # lbl_ref:   (tb, 1)  int32 labels
    # out_ref:   (tb, tc) output logit tile          (out dtype)
    # inv_s_ref: (1, tc)  f32 scratch: s / ||k_col|| (computed once per column tile)
    j = pl.program_id(0)  # column-tile index (outer, parallel)
    i = pl.program_id(1)  # batch-tile index  (inner, arbitrary)

    # Per-column normalization from the resident weight tile: only at the first
    # batch tile of each column tile.  Stays in a VMEM scratch for i > 0.
    @pl.when(i == 0)
    def _():
        k = ker_ref[...].astype(jnp.float32)
        sq = jnp.sum(k * k, axis=0, keepdims=True)                 # (1, tc)
        inv_s_ref[...] = jax.lax.rsqrt(jnp.maximum(sq, 1e-12)) * s  # fold s in

    # MXU matmul with f32 accumulation; normalization (and s) folded into the
    # (tb, tc) result instead of rescaling the (E, tc) weight tile.
    raw = jnp.dot(emb_ref[...], ker_ref[...], preferred_element_type=jnp.float32)
    cos_s = jnp.clip(raw * inv_s_ref[...], -s, s)                   # == s*clip(cos, -1, 1)

    # Additive margin (m*s) on the label column only: (1, tc) iota broadcasts
    # against the (tb, 1) labels -> (tb, tc) mask, no full-tile iota needed.
    col_ids = jax.lax.broadcasted_iota(jnp.int32, (1, tc), 1) + j * tc
    is_label = col_ids == lbl_ref[...]
    out_ref[...] = jnp.where(is_label, cos_s - (m * s), cos_s).astype(out_ref.dtype)


def am_softmax_forward(
    embeddings,
    kernel,
    label,
    *,
    m=M_MARGIN,
    s=S_SCALE,
    compute_dtype=jnp.bfloat16,
    out_dtype=None,
    tc_target=None,
    tb_cap=256,
):
    """embeddings: (B, E), kernel: (E, C), label: (B,) int -> (B, C) logits."""
    B, E = embeddings.shape
    E2, C = kernel.shape
    assert E == E2, "embedding size mismatch"
    if out_dtype is None:
        out_dtype = compute_dtype

    itemsize = jnp.dtype(compute_dtype).itemsize
    out_itemsize = jnp.dtype(out_dtype).itemsize

    # Per-generation VMEM budget: leave 16 MiB headroom below physical VMEM and
    # never exceed 100 MiB (v5e/v6e have 128 MiB, v7x has 64 MiB -> ~48 MiB).
    try:
        info = pltpu.get_tpu_info()
        vmem_cap = int(getattr(info, "vmem_capacity_bytes", 64 << 20))
    except Exception:  # conservative fallback if the query is unavailable
        vmem_cap = 64 << 20
    vmem_budget = max(32 << 20, min(100 << 20, vmem_cap - (16 << 20)))

    if tc_target is None:
        tc_target = 2048 if vmem_budget >= (96 << 20) else 1024

    # Column tile: lane-dense multiple of 128 that divides the 128-rounded class
    # count (so no extra pad pass from C % tc) and fits the VMEM budget with the
    # double-buffered (E, tc) weight tile using at most ~half the budget.
    Cp = _round_up(C, 128)
    max_tc_vmem = max(128, ((vmem_budget // 2) // max(1, 2 * E * itemsize)) // 128 * 128)
    tc = _pick_tc(Cp, min(tc_target, max_tc_vmem))

    # Batch tile: multiple of 16 (bf16 sublane packing), capped to the MXU-friendly 256.
    tb = min(_round_up(B, 16), tb_cap)
    Bp = _round_up(B, tb)

    # Operand prep.  The only pass over the big (E, C) weight here is the dtype
    # cast (skipped if already in compute_dtype) and, only when C % 128 != 0, a
    # tail pad that XLA fuses with the cast.  NOTE: E=512 (module default) is
    # already MXU-aligned; if E were unaligned, align it once upstream.
    ker = kernel if kernel.dtype == compute_dtype else kernel.astype(compute_dtype)
    if Cp != C:
        ker = jnp.pad(ker, ((0, 0), (0, Cp - C)))
    emb = embeddings.astype(compute_dtype)
    if Bp != B:
        emb = jnp.pad(emb, ((0, Bp - B), (0, 0)))
    lbl = label.reshape(-1).astype(jnp.int32)
    if Bp != B:
        lbl = jnp.pad(lbl, (0, Bp - B))
    lbl2 = lbl.reshape(Bp, 1)

    n_c = Cp // tc
    n_b = Bp // tb

    # VMEM hint: double-buffered tiles + scratch + headroom, clamped to budget.
    block_bytes = (
        2 * tb * E * itemsize        # embeddings row tile
        + 2 * E * tc * itemsize      # kernel column tile
        + 2 * tb * tc * out_itemsize # output tile
        + 2 * tb * 128 * 4           # labels ((tb, 1) pads lanes to 128)
        + 8 * tc * 4                 # inv scratch ((1, tc) pads sublanes to 8)
    )
    vmem_limit = int(min(max(block_bytes + (8 << 20), 32 << 20), vmem_budget))

    kern = functools.partial(_am_softmax_kernel, tc=tc, m=float(m), s=float(s))
    out = pl.pallas_call(
        kern,
        out_shape=jax.ShapeDtypeStruct((Bp, Cp), out_dtype),
        grid_spec=pltpu.PrefetchScalarGridSpec(
            num_scalar_prefetch=0,
            # Column tiles outer (parallel -> megacore shards columns, weight
            # streamed once per chip), batch tiles inner (arbitrary -> the
            # (E, tc) weight tile and the inv_s scratch stay resident across
            # the batch loop of each column tile).
            grid=(n_c, n_b),
            in_specs=[
                pl.BlockSpec((tb, E), lambda j, i: (i, 0)),   # embeddings row tile
                pl.BlockSpec((E, tc), lambda j, i: (0, j)),   # kernel column tile
                pl.BlockSpec((tb, 1), lambda j, i: (i, 0)),   # labels row tile
            ],
            out_specs=pl.BlockSpec((tb, tc), lambda j, i: (i, j)),
            scratch_shapes=[pltpu.VMEM((1, tc), jnp.float32)],
        ),
        compiler_params=pltpu.CompilerParams(
            dimension_semantics=("parallel", "arbitrary"),
            vmem_limit_bytes=vmem_limit,
        ),
    )(emb, ker, lbl2)

    return out[:B, :C]


def am_softmax_reference(embeddings, kernel, label, m=M_MARGIN, s=S_SCALE):
    kernel_norm = kernel / jnp.linalg.norm(kernel, axis=0, keepdims=True)
    cos = jnp.clip(embeddings @ kernel_norm, -1.0, 1.0)
    phi = cos - m
    onehot = jax.nn.one_hot(label, kernel.shape[1], dtype=bool)
    return jnp.where(onehot, phi, cos) * s


if __name__ == "__main__":
    # Small synthetic shapes consistent with the module (embedding_size, classnum).
    B, E, C = 8, 32, 256

    key = jax.random.PRNGKey(0)
    k_emb, k_ker, k_lbl = jax.random.split(key, 3)

    embeddings = jax.random.normal(k_emb, (B, E), dtype=jnp.float32)

    # Deterministic init mimicking Tensor(E, C).uniform_(-1,1).renorm_(2,1,1e-5).mul_(1e5):
    # each column ends up with unit L2 norm.
    raw = jax.random.uniform(k_ker, (E, C), minval=-1.0, maxval=1.0, dtype=jnp.float32)
    kernel = raw / jnp.linalg.norm(raw, axis=0, keepdims=True)

    label = jax.random.randint(k_lbl, (B,), 0, C, dtype=jnp.int32)

    ref = am_softmax_reference(embeddings, kernel, label)

    # Exact f32 path.
    out_f32 = am_softmax_forward(embeddings, kernel, label, compute_dtype=jnp.float32)
    out_f32 = jax.block_until_ready(out_f32)
    assert out_f32.shape == (B, C)
    assert jnp.allclose(out_f32, ref, atol=2e-4, rtol=1e-4), "f32 mismatch vs reference"

    # Default bandwidth-optimized path (bf16 operands + bf16 logits): compare at
    # the pre-scale cosine level with a bound tight enough to catch regressions.
    out_bf16 = jax.block_until_ready(am_softmax_forward(embeddings, kernel, label))
    assert out_bf16.dtype == jnp.bfloat16
    cos_err = jnp.max(jnp.abs(out_bf16.astype(jnp.float32) / S_SCALE - ref / S_SCALE))
    assert cos_err < 4e-2, f"bf16 path cosine error too large: {cos_err}"

    # Non-aligned shapes exercise the padding path (B not multiple of 16,
    # C not multiple of 128).
    B2, C2 = 5, 200
    emb2 = jax.random.normal(jax.random.PRNGKey(1), (B2, E), dtype=jnp.float32)
    raw2 = jax.random.uniform(jax.random.PRNGKey(2), (E, C2), minval=-1.0, maxval=1.0,
                              dtype=jnp.float32)
    ker2 = raw2 / jnp.linalg.norm(raw2, axis=0, keepdims=True)
    lbl2 = jax.random.randint(jax.random.PRNGKey(3), (B2,), 0, C2, dtype=jnp.int32)
    out2 = jax.block_until_ready(
        am_softmax_forward(emb2, ker2, lbl2, compute_dtype=jnp.float32))
    ref2 = am_softmax_reference(emb2, ker2, lbl2)
    assert out2.shape == (B2, C2)
    assert jnp.allclose(out2, ref2, atol=2e-4, rtol=1e-4), "padded-shape mismatch"

    print("KERNEL_OK")
</pallas_src>

<mosaic_0001>
module attributes {stable_mosaic.version = 11 : i64} {
  func.func @_am_softmax_kernel(%arg0: i32, %arg1: i32, %arg2: memref<16x32xf32, #tpu.memory_space<vmem>>, %arg3: memref<32x256xf32, #tpu.memory_space<vmem>>, %arg4: memref<16x1xi32, #tpu.memory_space<vmem>>, %arg5: memref<16x256xf32, #tpu.memory_space<vmem>>, %arg6: memref<1x256xf32, #tpu.memory_space<vmem>>) attributes {dimension_semantics = [#tpu.dimension_semantics<parallel>, #tpu.dimension_semantics<arbitrary>], iteration_bounds = array<i64: 1, 1>, scalar_prefetch = 0 : i64, scratch_operands = 1 : i64, tpu.core_type = #tpu.core_type<tc>, window_params = [{transform_indices = @transform_0, window_bounds = array<i64: 16, 32>}, {transform_indices = @transform_1, window_bounds = array<i64: 32, 256>}, {transform_indices = @transform_2, window_bounds = array<i64: 16, 1>}, {transform_indices = @transform_3, window_bounds = array<i64: 16, 256>}]} {
    %c0_i32 = arith.constant 0 : i32
    %0 = arith.cmpi eq, %arg1, %c0_i32 : i32
    %1 = arith.extui %0 : i1 to i32
    %c0_i32_0 = arith.constant 0 : i32
    %2 = arith.cmpi ne, %1, %c0_i32_0 : i32
    scf.if %2 {
      %c0_13 = arith.constant 0 : index
      %c0_14 = arith.constant 0 : index
      %25 = vector.load %arg3[%c0_13, %c0_14] : memref<32x256xf32, #tpu.memory_space<vmem>>, vector<32x256xf32>
      %26 = arith.mulf %25, %25 : vector<32x256xf32>
      %cst_15 = arith.constant dense<0.000000e+00> : vector<256xf32>
      %27 = vector.multi_reduction <add>, %26, %cst_15 [0] : vector<32x256xf32> to vector<256xf32>
      %28 = vector.shape_cast %27 : vector<256xf32> to vector<1x256xf32>
      %cst_16 = arith.constant 9.99999996E-13 : f32
      %29 = vector.broadcast %cst_16 : f32 to vector<1x256xf32>
      %30 = arith.maximumf %28, %29 : vector<1x256xf32>
      %31 = math.rsqrt %30 : vector<1x256xf32>
      %cst_17 = arith.constant 3.000000e+01 : f32
      %32 = vector.broadcast %cst_17 : f32 to vector<1x256xf32>
      %33 = arith.mulf %31, %32 : vector<1x256xf32>
      %c0_18 = arith.constant 0 : index
      %c0_19 = arith.constant 0 : index
      %34 = vector.load %arg6[%c0_18, %c0_19] : memref<1x256xf32, #tpu.memory_space<vmem>>, vector<1x256xf32>
      tpu.vector_store %arg6[%c0_18, %c0_19], %33 {strides = array<i32>} : memref<1x256xf32, #tpu.memory_space<vmem>>, vector<1x256xf32>,
    } else {
    }
    %c0 = arith.constant 0 : index
    %c0_1 = arith.constant 0 : index
    %3 = vector.load %arg2[%c0, %c0_1] : memref<16x32xf32, #tpu.memory_space<vmem>>, vector<16x32xf32>
    %c0_2 = arith.constant 0 : index
    %c0_3 = arith.constant 0 : index
    %4 = vector.load %arg3[%c0_2, %c0_3] : memref<32x256xf32, #tpu.memory_space<vmem>>, vector<32x256xf32>
    %cst = arith.constant dense<0.000000e+00> : vector<16x256xf32>
    %5 = tpu.matmul %3, %4, %cst {dimension_numbers = #tpu.dot_dimension_numbers<[1], [0], [0], [1], [0, 0, 1, 1], [], []>} : vector<16x32xf32>, vector<32x256xf32>, vector<16x256xf32> -> vector<16x256xf32>
    %c0_4 = arith.constant 0 : index
    %c0_5 = arith.constant 0 : index
    %6 = vector.load %arg6[%c0_4, %c0_5] : memref<1x256xf32, #tpu.memory_space<vmem>>, vector<1x256xf32>
    %7 = vector.broadcast %6 : vector<1x256xf32> to vector<16x256xf32>
    %8 = arith.mulf %5, %7 : vector<16x256xf32>
    %cst_6 = arith.constant -3.000000e+01 : f32
    %cst_7 = arith.constant 3.000000e+01 : f32
    %9 = vector.broadcast %cst_6 : f32 to vector<16x256xf32>
    %10 = arith.maximumf %9, %8 : vector<16x256xf32>
    %11 = vector.broadcast %cst_7 : f32 to vector<16x256xf32>
    %12 = arith.minimumf %11, %10 : vector<16x256xf32>
    %13 = tpu.iota {dimensions = array<i32: 1>} : vector<1x256xi32>
    %c256_i32 = arith.constant 256 : i32
    %14 = arith.muli %arg0, %c256_i32 : i32
    %15 = vector.broadcast %14 : i32 to vector<1x256xi32>
    %16 = arith.addi %13, %15 : vector<1x256xi32>
    %c0_8 = arith.constant 0 : index
    %c0_9 = arith.constant 0 : index
    %17 = vector.load %arg4[%c0_8, %c0_9] : memref<16x1xi32, #tpu.memory_space<vmem>>, vector<16x1xi32>
    %18 = vector.broadcast %16 : vector<1x256xi32> to vector<16x256xi32>
    %19 = vector.broadcast %17 : vector<16x1xi32> to vector<16x256xi32>
    %20 = arith.cmpi eq, %18, %19 : vector<16x256xi32>
    %cst_10 = arith.constant 1.050000e+01 : f32
    %21 = vector.broadcast %cst_10 : f32 to vector<16x256xf32>
    %22 = arith.subf %12, %21 : vector<16x256xf32>
    %23 = arith.select %20, %22, %12 : vector<16x256xi1>, vector<16x256xf32>
    %c0_11 = arith.constant 0 : index
    %c0_12 = arith.constant 0 : index
    %24 = vector.load %arg5[%c0_11, %c0_12] : memref<16x256xf32, #tpu.memory_space<vmem>>, vector<16x256xf32>
    tpu.vector_store %arg5[%c0_11, %c0_12], %23 {strides = array<i32>} : memref<16x256xf32, #tpu.memory_space<vmem>>, vector<16x256xf32>,
    return
  }
  func.func @transform_0(%arg0: i32, %arg1: i32) -> (i32, i32) {
    %c0_i32 = arith.constant 0 : i32
    %c0_i32_0 = arith.constant 0 : i32
    return %arg1, %c0_i32 : i32, i32
  }
  func.func @transform_1(%arg0: i32, %arg1: i32) -> (i32, i32) {
    %c0_i32 = arith.constant 0 : i32
    %c0_i32_0 = arith.constant 0 : i32
    return %c0_i32, %arg0 : i32, i32
  }
  func.func @transform_2(%arg0: i32, %arg1: i32) -> (i32, i32) {
    %c0_i32 = arith.constant 0 : i32
    %c0_i32_0 = arith.constant 0 : i32
    return %arg1, %c0_i32 : i32, i32
  }
  func.func @transform_3(%arg0: i32, %arg1: i32) -> (i32, i32) {
    %c0_i32 = arith.constant 0 : i32
    return %arg1, %arg0 : i32, i32
  }
}

</mosaic_0001>

<llo_original>
// kernel: tpu_custom_call.1
$region0: #{tpu_custom_call.1}
  #allocation0 [shape = 'u32[]', space=smem, size = 0x4, offset = 0x4, fixed_abs, tag = 'smem constant byte address 0x4 - core index']
  #allocation1 [shape = 'u32[144,128]{1,0:T(1,128)}', space=vmem, size = 0x12000, scoped, tag = 'internal scratch']
  #allocation2 [shape = 'f32[1,256]{1,0:T(1,128)}', space=vmem, size = 0x400, scoped, tag = 'scratch operand']
  %s0 = inlined_call_operand.vmem [shape: f32[16,32], index: 0, kind: input, shape index: {}]
  %s1 = inlined_call_operand.hbm [shape: f32[32,256], index: 1, kind: input, shape index: {}]
  %s2 = inlined_call_operand.vmem [shape: s32[16,1], index: 2, kind: input, shape index: {}]
  %s3 = inlined_call_operand.hbm [shape: f32[16,256], index: 3, kind: output, shape index: {}]
  %s4 = sld [smem:[#allocation0]]
  $region30: #{tpu_custom_call.1} parent=0
    _
  %s6 = ssub.s32 1, %s4
  %s7 = scalar_select 0, %s6, %s4
  $region1: #{tpu_custom_call.1} parent=0
    #allocation3 [shape = 'u8[32768]{0}', space=vmem, size = 0x8000, scoped, tag = 'input window, operand 1, single buffered']
    #allocation4 [shape = 's32[1]{0}', space=sflag, size = 0x4, scoped, tag = 'scoped memory for tpu_custom_call.1']
    #allocation5 [shape = 's32[1]{0}', space=sflag, size = 0x4, scoped, tag = 'scoped memory for tpu_custom_call.1']
    #allocation6 [shape = 'u8[16384]{0}', space=vmem, size = 0x4000, scoped, tag = 'output window, operand 0, single buffered']
    %8 = vsyncpa [#allocation4], 0
    %9 = vsyncpa [#allocation5], 0
    // Predicated region
    $region2: #{tpu_custom_call.1} parent=1 // pred_check
      _
    $region3: #{tpu_custom_call.1} parent=1 // pred_check_branch
      %11 = sbr.rel (0) target = $region5
    $region4: #{tpu_custom_call.1} parent=1 // pred_region
      _
    $region5: #{tpu_custom_call.1} parent=1 // pred_fallthru
      _
    // Predicated region
    $region6: #{tpu_custom_call.1} parent=1 // pred_check
      _
    $region7: #{tpu_custom_call.1} parent=1 // pred_check_branch
      %13 = sbr.rel (0) target = $region9
    $region8: #{tpu_custom_call.1} parent=1 // pred_region
      %s15 = ssub.s32 1024, 1024
      %16 = vsyncadd [#allocation4], %s15
      %s17 = sshll.u32 [#allocation3], 4
      %s18 = int_to_ptr.vmem [resolvable:$true] %s17
      %23 = dma.hbm_to_vmem [thread:$0]  %s1, 1024, %s18, [#allocation4], 256, 256, 16
    $region9: #{tpu_custom_call.1} parent=1 // pred_fallthru
      _
    // Predicated region
    $region10: #{tpu_custom_call.1} parent=1 // pred_check
      _
    $region11: #{tpu_custom_call.1} parent=1 // pred_check_branch
      %25 = sbr.rel (0) target = $region13
    $region12: #{tpu_custom_call.1} parent=1 // pred_region
      _
    $region13: #{tpu_custom_call.1} parent=1 // pred_fallthru
      _
    // Predicated region
    $region14: #{tpu_custom_call.1} parent=1 // pred_check
      _
    $region15: #{tpu_custom_call.1} parent=1 // pred_check_branch
      %27 = sbr.rel (0) target = $region17
    $region16: #{tpu_custom_call.1} parent=1 // pred_region
      %28 = dma.done [#allocation4], 1024
    $region17: #{tpu_custom_call.1} parent=1 // pred_fallthru
      _
    %p29 = scmp.eq.s32.totalorder 0, 0
    // Predicated region
    $region18: #{tpu_custom_call.1} parent=1 // pred_check
      %p30 = pneg %p29
    $region19: #{tpu_custom_call.1} parent=1 // pred_check_branch
      %32 = sbr.rel (%p30) target = $region21
    $region20: #{tpu_custom_call.1} parent=1 // pred_region
      %v33 = vld [vmem:[#allocation3] sm:$0xff]
      %v34 = vld [vmem:[#allocation3 + $0x8] sm:$0xff]
      %v35 = vld [vmem:[#allocation3 + $0x10] sm:$0xff]
      %v36 = vld [vmem:[#allocation3 + $0x18] sm:$0xff]
      %v37 = vld [vmem:[#allocation3 + $0x20] sm:$0xff]
      %v38 = vld [vmem:[#allocation3 + $0x28] sm:$0xff]
      %v39 = vld [vmem:[#allocation3 + $0x30] sm:$0xff]
      %v40 = vld [vmem:[#allocation3 + $0x38] sm:$0xff]
      %v41 = vmul.f32 %v33, %v33
      %v42 = vmul.f32 %v34, %v34
      %v43 = vmul.f32 %v35, %v35
      %v44 = vmul.f32 %v36, %v36
      %v45 = vmul.f32 %v37, %v37
      %v46 = vmul.f32 %v38, %v38
      %v47 = vmul.f32 %v39, %v39
      %v48 = vmul.f32 %v40, %v40
      %v49 = vadd.f32 %v41, %v43
      %v50 = vadd.f32 %v49, %v45
      %v51 = vadd.f32 %v50, %v47
      %v52 = vrot.slane %v51, 4
      %v53 = vadd.f32 %v51, %v52
      %v54 = vrot.slane %v53, 2
      %v55 = vadd.f32 %v53, %v54
      %v56 = vrot.slane %v55, 1
      %v57 = vadd.f32 %v55, %v56
      %v58 = vadd.f32 %v42, %v44
      %v59 = vadd.f32 %v58, %v46
      %v60 = vadd.f32 %v59, %v48
      %v61 = vrot.slane %v60, 4
      %v62 = vadd.f32 %v60, %v61
      %v63 = vrot.slane %v62, 2
      %v64 = vadd.f32 %v62, %v63
      %v65 = vrot.slane %v64, 1
      %v66 = vadd.f32 %v64, %v65
      %v67 = vmax.f32 %v57, 1e-12
      %v68 = vmax.f32 %v66, 1e-12
      %v69 = vrsqrt.pop %v67
      %v70 = vrsqrt.pop %v68
      %v71 = vmul.f32 %v69, 30.0
      %v72 = vmul.f32 %v70, 30.0
      %v75 = vcombine.low %v71, %v72
      %v77 = vunpack.c.l.s4 1966171168
      %v78 = vunpack.c.0.s8 %v77
      %v79 = vlaneseq
      %v80 = vshrl.u32 %v79, 7
      %v81 = vsub.s32 %v78, %v80
      %v82 = vrot.slane %v75, %v81
      %v84 = vunpack.c.l.s4 1966171168
      %v85 = vunpack.c.0.s8 %v84
      %v86 = vlaneseq
      %v87 = vshrl.u32 %v86, 7
      %v88 = vsub.s32 %v85, %v87
      %v89 = vrot.slane %v82, %v88
      %v91 = vlaneseq
      %vm92 = vcmp.ge.s32.totalorder %v91, 0
      %vm93 = vcmp.lt.s32.totalorder %v91, 256
      %vm94 = vmand %vm92, %vm93
      %95 = vst.msk [vmem:[#allocation2] sm:$0x3] %vm94, %v89
    $region21: #{tpu_custom_call.1} parent=1 // pred_fallthru
      _
    %v96 = vld [vmem:[%s0] sm:$0xff]
    %v97 = vld [vmem:[%s0 + $0x8] sm:$0xff]
    %v98 = vld [vmem:[#allocation3] sm:$0xff]
    %v99 = vld [vmem:[#allocation3 + $0x8] sm:$0xff]
    %v100 = vld [vmem:[#allocation3 + $0x10] sm:$0xff]
    %v101 = vld [vmem:[#allocation3 + $0x18] sm:$0xff]
    %v102 = vld [vmem:[#allocation3 + $0x20] sm:$0xff]
    %v103 = vld [vmem:[#allocation3 + $0x28] sm:$0xff]
    %v104 = vld [vmem:[#allocation3 + $0x30] sm:$0xff]
    %v105 = vld [vmem:[#allocation3 + $0x38] sm:$0xff]
    %vm106 = vcmask 261120
    %v108 = vsel %vm106, %v96, 0
    %v111 = vsel %vm106, %v97, 0
    %113 = vmatprep.subr.mxu0 0.0
    %114 = vmatpush1.msra.mxu0 0.0
    %115 = vmatprep.subr.mxu0 0.0
    %116 = vmatpush1.msra.mxu0 0.0
    %117 = vmatprep.subr.mxu0 0.0
    %118 = vmatpush1.msra.mxu0 0.0
    %119 = vmatprep.subr.mxu0 0.0
    %120 = vmatpush1.msra.mxu0 0.0
    %121 = vmatprep.subr.mxu0 0.0
    %122 = vmatpush1.msra.mxu0 0.0
    %123 = vmatprep.subr.mxu0 0.0
    %124 = vmatpush1.msra.mxu0 0.0
    %125 = vmatprep.subr.mxu0 0.0
    %126 = vmatpush1.msra.mxu0 0.0
    %127 = vmatprep.subr.mxu0 0.0
    %128 = vmatpush1.msra.mxu0 0.0
    %129 = vmatprep.subr.mxu0 0.0
    %130 = vmatpush1.msra.mxu0 0.0
    %131 = vmatprep.subr.mxu0 0.0
    %132 = vmatpush1.msra.mxu0 0.0
    %133 = vmatprep.subr.mxu0 0.0
    %134 = vmatpush1.msra.mxu0 0.0
    %135 = vmatprep.subr.mxu0 0.0
    %136 = vmatpush1.msra.mxu0 0.0
    %137 = vmatprep.subr.mxu0 %v105
    %138 = vmatpush1.msra.mxu0 %v104
    %139 = vmatprep.subr.mxu0 %v103
    %140 = vmatpush1.msra.mxu0 %v102
    %141 = vmatprep.subr.mxu0 %v101
    %142 = vmatpush1.msra.mxu0 %v100
    %143 = vmatprep.subr.mxu0 %v99
    %144 = vmatpush1.msra.mxu0 %v98
    %145 = vmatprep.subr.mxu0 0.0
    %146 = vmatpush2.msra.mxu0 0.0
    %147 = vmatprep.subr.mxu0 0.0
    %148 = vmatpush2.msra.mxu0 0.0
    %149 = vmatprep.subr.mxu0 0.0
    %150 = vmatpush2.msra.mxu0 0.0
    %151 = vmatprep.subr.mxu0 0.0
    %152 = vmatpush2.msra.mxu0 0.0
    %153 = vmatprep.subr.mxu0 0.0
    %154 = vmatpush2.msra.mxu0 0.0
    %155 = vmatprep.subr.mxu0 0.0
    %156 = vmatpush2.msra.mxu0 0.0
    %157 = vmatprep.subr.mxu0 0.0
    %158 = vmatpush2.msra.mxu0 0.0
    %159 = vmatprep.subr.mxu0 0.0
    %160 = vmatpush2.msra.mxu0 0.0
    %161 = vmatprep.subr.mxu0 0.0
    %162 = vmatpush2.msra.mxu0 0.0
    %163 = vmatprep.subr.mxu0 0.0
    %164 = vmatpush2.msra.mxu0 0.0
    %165 = vmatprep.subr.mxu0 0.0
    %166 = vmatpush2.msra.mxu0 0.0
    %167 = vmatprep.subr.mxu0 0.0
    %168 = vmatpush2.msra.mxu0 0.0
    %169 = vmatprep.subr.mxu0 0.0
    %170 = vmatpush2.msra.mxu0 0.0
    %171 = vmatprep.subr.mxu0 0.0
    %172 = vmatpush2.msra.mxu0 0.0
    %173 = vmatprep.subr.mxu0 0.0
    %174 = vmatpush2.msra.mxu0 0.0
    %175 = vmatprep.subr.mxu0 0.0
    %176 = vmatpush2.msra.mxu0 0.0
    %177 = vmatprep.mubr.f32.mxu0 0.0
    %178 = vmatmul.mubr.f32.gmra.mxu0 %v108
    %v179 = vpop.f32.mrf.mxu0
    %v180 = vadd.f32 0.0, %v179
    %v181 = vpop.f32.mrf.mxu0
    %v182 = vadd.f32 0.0, %v181
    %183 = vmatprep.mubr.f32.mxu0 0.0
    %184 = vmatmul.mubr.f32.gmra.mxu0 %v111
    %v185 = vpop.f32.mrf.mxu0
    %v186 = vadd.f32 0.0, %v185
    %v187 = vpop.f32.mrf.mxu0
    %v188 = vadd.f32 0.0, %v187
    %189 = vdwg.mxu0
    %v190 = vld [vmem:[#allocation2] sm:$0x3]
    %v192 = vlaneseq
    %v193 = vshrl.u32 %v192, 7
    %v194 = vsub.s32 0, %v193
    %v195 = vrot.slane %v190, %v194
    %v196 = vlaneseq
    %v197 = vshrl.u32 %v196, 7
    %v198 = vsub.s32 1, %v197
    %v199 = vrot.slane %v190, %v198
    %v202 = vmul.f32 %v180, %v195
    %v203 = vmul.f32 %v182, %v199
    %v204 = vmul.f32 %v186, %v195
    %v205 = vmul.f32 %v188, %v199
    %v206 = vmax.f32 %v202, -30.0
    %v207 = vmax.f32 %v203, -30.0
    %v208 = vmax.f32 %v204, -30.0
    %v209 = vmax.f32 %v205, -30.0
    %v210 = vmin.f32 %v206, 30.0
    %v211 = vmin.f32 %v207, 30.0
    %v212 = vmin.f32 %v208, 30.0
    %v213 = vmin.f32 %v209, 30.0
    %v214 = vlaneseq
    %v215 = vand.u32 %v214, 127
    %v216 = vadd.s32 %v215, 128
    %s217 = smul.u32 0, 256
    %v218 = vstv %s217
    %v219 = vadd.s32 %v215, %v218
    %v220 = vadd.s32 %v216, %v218
    %v221 = vld [vmem:[%s2] sm:$0xff]
    %v222 = vld [vmem:[%s2 + $0x8] sm:$0xff]
    %223 = vset.pattern.permute.xlu0 0
    %224 = vperm.xlu0 %223, %v221
    %v225 = vpop.permute.xlu0 %224
    %226 = vset.pattern.permute.xlu0 0
    %227 = vperm.xlu0 %226, %v222
    %v228 = vpop.permute.xlu0 %227
    %vm229 = vcmp.eq.s32.totalorder %v219, %v225
    %vm230 = vcmp.eq.s32.totalorder %v220, %v225
    %vm231 = vcmp.eq.s32.totalorder %v219, %v228
    %vm232 = vcmp.eq.s32.totalorder %v220, %v228
    %v233 = vsub.f32 %v210, 10.5
    %v234 = vsub.f32 %v211, 10.5
    %v235 = vsub.f32 %v212, 10.5
    %v236 = vsub.f32 %v213, 10.5
    %v237 = vsel %vm229, %v233, %v210
    %v238 = vsel %vm230, %v234, %v211
    %v239 = vsel %vm231, %v235, %v212
    %v240 = vsel %vm232, %v236, %v213
    %241 = vst [vmem:[#allocation6] sm:$0xff] %v237
    %242 = vst [vmem:[#allocation6 + $0x8] sm:$0xff] %v238
    %243 = vst [vmem:[#allocation6 + $0x10] sm:$0xff] %v239
    %244 = vst [vmem:[#allocation6 + $0x18] sm:$0xff] %v240
    // Predicated region
    $region22: #{tpu_custom_call.1} parent=1 // pred_check
      _
    $region23: #{tpu_custom_call.1} parent=1 // pred_check_branch
      %246 = sbr.rel (0) target = $region25
    $region24: #{tpu_custom_call.1} parent=1 // pred_region
      %s248 = ssub.s32 512, 512
      %249 = vsyncadd [#allocation5], %s248
      %s250 = sshll.u32 [#allocation6], 4
      %s251 = int_to_ptr.vmem [resolvable:$true] %s250
      %256 = dma.vmem_to_hbm [thread:$0]  %s251, 512, %s3, [#allocation5], 256, 256, 16
    $region25: #{tpu_custom_call.1} parent=1 // pred_fallthru
      _
    // Predicated region
    $region26: #{tpu_custom_call.1} parent=1 // pred_check
      _
    $region27: #{tpu_custom_call.1} parent=1 // pred_check_branch
      %258 = sbr.rel (0) target = $region29
    $region28: #{tpu_custom_call.1} parent=1 // pred_region
      %259 = dma.done [#allocation5], 512
    $region29: #{tpu_custom_call.1} parent=1 // pred_fallthru
      _
    %260 = vsyncpa [#allocation4], 1
    %261 = vsyncpa [#allocation5], 1

</llo_original>
